<compile_context>
chip_gen: v5e
topology: v5e:2x2
jax: 0.10.0
libtpu: 0.0.40
codegen_flags: <defaults>
</compile_context>

<pallas_src>
import jax
import jax.numpy as jnp
from jax.experimental import pallas as pl
from jax.experimental.pallas import tpu as pltpu


_LANE = 128
# Data-tile VMEM budget (double-buffered in/out + f32 accumulator), sized with
# headroom against v7x's 64 MiB physical VMEM (v5e/v6e have 128 MiB).
_TILE_VMEM_BUDGET = 24 * 1024 * 1024
_VMEM_LIMIT_BYTES = 32 * 1024 * 1024


def _conv1x1_kernel(w_ref, b_ref, x_ref, o_ref):
    # w_ref: (NC, C)   conv weight, resident in VMEM (constant index_map)
    # b_ref: (NC, 1)   f32 bias, resident in VMEM
    # x_ref: (C, ts)   one spatial tile of one batch element (channel-major)
    # o_ref: (NC, ts)  output tile
    acc = jnp.dot(w_ref[...], x_ref[...], preferred_element_type=jnp.float32)
    o_ref[...] = (acc + b_ref[...]).astype(o_ref.dtype)


def _round_up(v, m):
    return -(-v // m) * m


def _spatial_tile(hw, n_batch, c, nc, in_itemsize, out_itemsize):
    """Largest lane-aligned spatial tile that fits the VMEM budget."""
    # Bytes held in VMEM per spatial column:
    #   x tile (double-buffered) + out tile (double-buffered) + f32 accumulator.
    per_col = 2 * c * in_itemsize + 2 * nc * out_itemsize + nc * 4
    ts = _TILE_VMEM_BUDGET // per_col
    ts = max(_LANE, (ts // _LANE) * _LANE)

    if hw <= ts:
        ts = hw
        # v7x: 2 TensorCores per chip -- make sure the "parallel" grid has at
        # least 2 steps so both cores drive HBM.  Keep tiles lane-aligned.
        if n_batch == 1 and hw >= 2 * _LANE:
            ts = _round_up(pl.cdiv(hw, 2), _LANE)
    # Ragged spatial tails are masked by Pallas.  TODO(synk): for very large HW
    # that is not a multiple of 128, padding HW in the wrapper would make the
    # tail store lane-dense as well.
    return ts


def small_decoder2_forward(x_nchw, weight, bias, *, compute_dtype=None,
                           out_dtype=None):
    """Forward of small_decoder2 (inference: Dropout2d == identity).

    x_nchw:        (N, C, H, W)
    weight:        (num_classes, C, 1, 1)  -- PyTorch Conv2d weight layout
    bias:          (num_classes,)
    compute_dtype: optional matmul operand dtype (e.g. jnp.bfloat16 -- a good
                   default on v5e/v6e/v7x); accumulation is always f32.
    out_dtype:     optional stored output dtype (e.g. jnp.bfloat16 to halve the
                   dominant output write stream); defaults to x's dtype.
    returns (N, num_classes, H, W)
    """
    N, C, H, W = x_nchw.shape
    NC = weight.shape[0]
    HW = H * W
    out_dtype = out_dtype if out_dtype is not None else x_nchw.dtype

    # Channel-major matmul operands: contiguous reshapes only, no transposes.
    x3 = x_nchw.reshape(N, C, HW)            # (N, C, HW)
    w2 = weight.reshape(NC, C)               # (NC, C)
    b2 = bias.reshape(NC, 1).astype(jnp.float32)

    if compute_dtype is not None:
        x3 = x3.astype(compute_dtype)
        w2 = w2.astype(compute_dtype)

    in_itemsize = jnp.dtype(x3.dtype).itemsize
    out_itemsize = jnp.dtype(out_dtype).itemsize

    ts = _spatial_tile(HW, N, C, NC, in_itemsize, out_itemsize)
    grid = (N, pl.cdiv(HW, ts))

    cost = pl.CostEstimate(
        flops=2 * N * NC * C * HW,
        transcendentals=0,
        bytes_accessed=(N * C * HW * in_itemsize          # x read
                        + NC * C * in_itemsize + NC * 4   # weight + bias read
                        + N * NC * HW * out_itemsize),    # output write
    )

    out3 = pl.pallas_call(
        _conv1x1_kernel,
        out_shape=jax.ShapeDtypeStruct((N, NC, HW), out_dtype),
        grid_spec=pltpu.PrefetchScalarGridSpec(
            num_scalar_prefetch=0,
            grid=grid,
            in_specs=[
                pl.BlockSpec((NC, C), lambda n, s: (0, 0)),           # weight (resident)
                pl.BlockSpec((NC, 1), lambda n, s: (0, 0)),           # bias   (resident)
                pl.BlockSpec((None, C, ts), lambda n, s: (n, 0, s)),  # x[n] tile
            ],
            out_specs=pl.BlockSpec((None, NC, ts), lambda n, s: (n, 0, s)),
        ),
        compiler_params=pltpu.CompilerParams(
            dimension_semantics=("parallel", "parallel"),
            vmem_limit_bytes=_VMEM_LIMIT_BYTES,
        ),
        cost_estimate=cost,
    )(w2, b2, x3)

    # Contiguous reshape back to NCHW -- no transpose, no slice.
    return out3.reshape(N, NC, H, W)


if __name__ == "__main__":
    # Small shapes consistent with the module's forward:
    #   batch=2, hidden_dim=32 channels, 8x8 spatial, num_classes=124 (default)
    batch, hidden_dim, H, W = 2, 32, 8, 8
    num_classes = 124

    key = jax.random.PRNGKey(0)
    k_x, k_w, k_b = jax.random.split(key, 3)

    x = jax.random.normal(k_x, (batch, hidden_dim, H, W), dtype=jnp.float32)

    # Deterministic parameter init (matches Conv2d default fan-in scaling).
    fan_in = hidden_dim  # kernel_size = 1
    bound = 1.0 / (fan_in ** 0.5)
    weight = jax.random.uniform(
        k_w, (num_classes, hidden_dim, 1, 1), minval=-bound, maxval=bound,
        dtype=jnp.float32)
    bias = jax.random.uniform(
        k_b, (num_classes,), minval=-bound, maxval=bound, dtype=jnp.float32)

    # Reference in plain JAX (1x1 conv == einsum over channels + bias).
    ref = jnp.einsum("nchw,oc->nohw", x, weight.reshape(num_classes, hidden_dim))
    ref = ref + bias.reshape(1, num_classes, 1, 1)

    # f32 path (tight tolerance).
    out = small_decoder2_forward(x, weight, bias)
    out = jax.block_until_ready(out)
    assert out.shape == (batch, num_classes, H, W)
    assert out.dtype == x.dtype
    assert jnp.allclose(out, ref, atol=1e-5, rtol=1e-5)

    # bf16 operands + bf16 output path (loose tolerance: bf16 rounding).
    out_bf16 = small_decoder2_forward(
        x, weight, bias, compute_dtype=jnp.bfloat16, out_dtype=jnp.bfloat16)
    out_bf16 = jax.block_until_ready(out_bf16)
    assert out_bf16.shape == (batch, num_classes, H, W)
    assert out_bf16.dtype == jnp.bfloat16
    assert jnp.allclose(out_bf16.astype(jnp.float32), ref, atol=1e-1, rtol=1e-1)

    print("KERNEL_OK")
</pallas_src>

<mosaic_0001>
module attributes {stable_mosaic.version = 11 : i64} {
  func.func @_conv1x1_kernel(%arg0: i32, %arg1: i32, %arg2: memref<124x32xf32, #tpu.memory_space<vmem>>, %arg3: memref<124x1xf32, #tpu.memory_space<vmem>>, %arg4: memref<1x32x64xf32, #tpu.memory_space<vmem>>, %arg5: memref<1x124x64xf32, #tpu.memory_space<vmem>>) attributes {dimension_semantics = [#tpu.dimension_semantics<parallel>, #tpu.dimension_semantics<parallel>], iteration_bounds = array<i64: 2, 1>, scalar_prefetch = 0 : i64, scratch_operands = 0 : i64, tpu.core_type = #tpu.core_type<tc>, window_params = [{pipeline_mode = #tpu.pipeline_mode<synchronous>, transform_indices = @transform_0, window_bounds = array<i64: 124, 32>}, {pipeline_mode = #tpu.pipeline_mode<synchronous>, transform_indices = @transform_1, window_bounds = array<i64: 124, 1>}, {transform_indices = @transform_2, window_bounds = array<i64: 1, 32, 64>}, {transform_indices = @transform_3, window_bounds = array<i64: 1, 124, 64>}]} {
    %c0 = arith.constant 0 : index
    %c0_0 = arith.constant 0 : index
    %0 = vector.load %arg2[%c0, %c0_0] : memref<124x32xf32, #tpu.memory_space<vmem>>, vector<124x32xf32>
    %c0_1 = arith.constant 0 : index
    %c0_2 = arith.constant 0 : index
    %c0_3 = arith.constant 0 : index
    %1 = vector.load %arg4[%c0_1, %c0_2, %c0_3] : memref<1x32x64xf32, #tpu.memory_space<vmem>>, vector<1x32x64xf32>
    %2 = vector.shape_cast %1 : vector<1x32x64xf32> to vector<32x64xf32>
    %cst = arith.constant dense<0.000000e+00> : vector<124x64xf32>
    %3 = tpu.matmul %0, %2, %cst {dimension_numbers = #tpu.dot_dimension_numbers<[1], [0], [0], [1], [0, 0, 1, 1], [], []>} : vector<124x32xf32>, vector<32x64xf32>, vector<124x64xf32> -> vector<124x64xf32>
    %c0_4 = arith.constant 0 : index
    %c0_5 = arith.constant 0 : index
    %4 = vector.load %arg3[%c0_4, %c0_5] : memref<124x1xf32, #tpu.memory_space<vmem>>, vector<124x1xf32>
    %5 = vector.broadcast %4 : vector<124x1xf32> to vector<124x64xf32>
    %6 = arith.addf %3, %5 : vector<124x64xf32>
    %c0_6 = arith.constant 0 : index
    %c0_7 = arith.constant 0 : index
    %c0_8 = arith.constant 0 : index
    %7 = vector.load %arg5[%c0_6, %c0_7, %c0_8] : memref<1x124x64xf32, #tpu.memory_space<vmem>>, vector<1x124x64xf32>
    %8 = vector.shape_cast %7 : vector<1x124x64xf32> to vector<124x64xf32>
    %9 = vector.shape_cast %6 : vector<124x64xf32> to vector<1x124x64xf32>
    tpu.vector_store %arg5[%c0_6, %c0_7, %c0_8], %9 {strides = array<i32>} : memref<1x124x64xf32, #tpu.memory_space<vmem>>, vector<1x124x64xf32>,
    return
  }
  func.func @transform_0(%arg0: i32, %arg1: i32) -> (i32, i32) {
    %c0_i32 = arith.constant 0 : i32
    %c0_i32_0 = arith.constant 0 : i32
    %c0_i32_1 = arith.constant 0 : i32
    return %c0_i32, %c0_i32_0 : i32, i32
  }
  func.func @transform_1(%arg0: i32, %arg1: i32) -> (i32, i32) {
    %c0_i32 = arith.constant 0 : i32
    %c0_i32_0 = arith.constant 0 : i32
    %c0_i32_1 = arith.constant 0 : i32
    return %c0_i32, %c0_i32_0 : i32, i32
  }
  func.func @transform_2(%arg0: i32, %arg1: i32) -> (i32, i32, i32) {
    %c0_i32 = arith.constant 0 : i32
    %c0_i32_0 = arith.constant 0 : i32
    return %arg0, %c0_i32, %arg1 : i32, i32, i32
  }
  func.func @transform_3(%arg0: i32, %arg1: i32) -> (i32, i32, i32) {
    %c0_i32 = arith.constant 0 : i32
    %c0_i32_0 = arith.constant 0 : i32
    return %arg0, %c0_i32, %arg1 : i32, i32, i32
  }
}

</mosaic_0001>

<llo_original>
// kernel: tpu_custom_call.1
$region0: #{tpu_custom_call.1}
  #allocation0 [shape = 'u32[]', space=smem, size = 0x4, offset = 0x4, fixed_abs, tag = 'smem constant byte address 0x4 - core index']
  #allocation1 [shape = 'u32[72,128]{1,0:T(1,128)}', space=vmem, size = 0x9000, scoped, tag = 'internal scratch']
  %s0 = inlined_call_operand.vmem [shape: f32[124,32], index: 0, kind: input, shape index: {}]
  %s1 = inlined_call_operand.vmem [shape: f32[124,1], index: 1, kind: input, shape index: {}]
  %s2 = inlined_call_operand.vmem [shape: f32[2,32,64], index: 2, kind: input, shape index: {}]
  %s3 = inlined_call_operand.vmem [shape: f32[2,124,64], index: 3, kind: output, shape index: {}]
  %s4 = sld [smem:[#allocation0]]
  $region45: #{tpu_custom_call.1} parent=0
    _
  %s6 = ssub.s32 1, %s4
  %s7 = scalar_select 0, %s6, %s4
  loop: start=0, step=1, limit=4
  $region2: #{tpu_custom_call.1} parent=0 // loop_pre_header
    _
  $region3: #{tpu_custom_call.1} parent=0 // loop_header
    %s9 = sphi 0, %s13
    %p10 = scmp.ge.s32.totalorder %s9, 4
    %s16 = sphi 0, %s28
    %s17 = sphi 0, %s24
    %s18 = sphi 0, %s16
    %s19 = sphi 0, %s17
    %s20 = sphi 0, %s18
    %s21 = sphi 0, %s19
    %s29 = sphi 0, %s29
    %s31 = sphi 0, %s29
    %s32 = sphi 0, %s31
    %s46 = sphi 0, %s32
    %s50 = sphi 0, %s50
    %s52 = sphi 0, %s50
    %s53 = sphi 0, %s52
    %s67 = sphi 0, %s53
    %s75 = sphi 0, %s77
    %s78 = sphi 0, %s75
    %s79 = sphi 0, %s78
    %s95 = sphi 0, %s79
    %s103 = sphi 0, %s105
    %s106 = sphi 0, %s103
    %s107 = sphi 0, %s106
    %s123 = sphi 0, %s107
  $region4: #{tpu_custom_call.1} parent=0 // loop_header_branch
    %12 = sbr.rel (%p10) target = $region8
  $region5: #{tpu_custom_call.1} parent=0 // loop_body
    %s14 = ssub.s32 %s9, 1
    %s15 = ssub.s32 %s9, 2
    %s22 = sadd.s32 1, %s17
    %p23 = scmp.ge.s32.totalorder %s22, 1
    %s24 = scalar_select %p23, 0, %s22
    %s25 = sadd.s32 1, %s16
    %s26 = scalar_select %p23, %s25, %s16
    %p27 = scmp.ge.s32.totalorder %s26, 2
    %s28 = scalar_select %p27, 0, %s26
    %s30 = sadd.s32 %s29, 1
    %p33 = scmp.eq.s32.totalorder %s9, 1
    %p34 = scmp.ne.s32.totalorder %s29, %s31
    %p35 = scmp.eq.s32.totalorder %s9, 0
    %p36 = por %p34, %p35
    %p37 = scmp.ne.s32.totalorder %s29, %s31
    %p38 = scmp.eq.s32.totalorder %s14, 1
    %p39 = por %p37, %p38
    %p40 = scmp.ne.s32.totalorder %s31, %s32
    %p41 = scmp.eq.s32.totalorder %s14, 0
    %p42 = por %p40, %p41
    %p43 = scmp.ne.s32.totalorder %s31, %s32
    %p44 = scmp.eq.s32.totalorder %s15, 1
    %p45 = por %p43, %p44
    %p47 = scmp.ne.s32.totalorder %s32, %s46
    %p48 = scmp.eq.s32.totalorder %s15, 0
    %p49 = por %p47, %p48
    %s51 = sadd.s32 %s50, 1
    %p54 = scmp.eq.s32.totalorder %s9, 1
    %p55 = scmp.ne.s32.totalorder %s50, %s52
    %p56 = scmp.eq.s32.totalorder %s9, 0
    %p57 = por %p55, %p56
    %p58 = scmp.ne.s32.totalorder %s50, %s52
    %p59 = scmp.eq.s32.totalorder %s14, 1
    %p60 = por %p58, %p59
    %p61 = scmp.ne.s32.totalorder %s52, %s53
    %p62 = scmp.eq.s32.totalorder %s14, 0
    %p63 = por %p61, %p62
    %p64 = scmp.ne.s32.totalorder %s52, %s53
    %p65 = scmp.eq.s32.totalorder %s15, 1
    %p66 = por %p64, %p65
    %p68 = scmp.ne.s32.totalorder %s53, %s67
    %p69 = scmp.eq.s32.totalorder %s15, 0
    %p70 = por %p68, %p69
    %s71 = ssub.s32 %s16, %s28
    %s72 = ssub.s32 %s17, %s24
    %s73 = sor.u32 %s71, %s72
    %p74 = scmp.eq.s32.totalorder %s73, 0
    %s76 = sadd.s32 %s75, 1
    %s77 = scalar_select %p74, %s75, %s76
    %p80 = pneg %p74
    %p81 = scmp.eq.s32.totalorder %s9, 1
    %p82 = por %p80, %p81
    %p83 = scmp.ne.s32.totalorder %s75, %s78
    %p84 = scmp.eq.s32.totalorder %s9, 0
    %p85 = por %p83, %p84
    %p86 = scmp.ne.s32.totalorder %s75, %s78
    %p87 = scmp.eq.s32.totalorder %s14, 1
    %p88 = por %p86, %p87
    %p89 = scmp.ne.s32.totalorder %s78, %s79
    %p90 = scmp.eq.s32.totalorder %s14, 0
    %p91 = por %p89, %p90
    %p92 = scmp.ne.s32.totalorder %s78, %s79
    %p93 = scmp.eq.s32.totalorder %s15, 1
    %p94 = por %p92, %p93
    %p96 = scmp.ne.s32.totalorder %s79, %s95
    %p97 = scmp.eq.s32.totalorder %s15, 0
    %p98 = por %p96, %p97
    %s99 = ssub.s32 %s16, %s28
    %s100 = ssub.s32 %s17, %s24
    %s101 = sor.u32 %s99, %s100
    %p102 = scmp.eq.s32.totalorder %s101, 0
    %s104 = sadd.s32 %s103, 1
    %s105 = scalar_select %p102, %s103, %s104
    %p108 = pneg %p102
    %p109 = scmp.eq.s32.totalorder %s9, 1
    %p110 = por %p108, %p109
    %p111 = scmp.ne.s32.totalorder %s103, %s106
    %p112 = scmp.eq.s32.totalorder %s9, 0
    %p113 = por %p111, %p112
    %p114 = scmp.ne.s32.totalorder %s103, %s106
    %p115 = scmp.eq.s32.totalorder %s14, 1
    %p116 = por %p114, %p115
    %p117 = scmp.ne.s32.totalorder %s106, %s107
    %p118 = scmp.eq.s32.totalorder %s14, 0
    %p119 = por %p117, %p118
    %p120 = scmp.ne.s32.totalorder %s106, %s107
    %p121 = scmp.eq.s32.totalorder %s15, 1
    %p122 = por %p120, %p121
    %p124 = scmp.ne.s32.totalorder %s107, %s123
    %p125 = scmp.eq.s32.totalorder %s15, 0
    %p126 = por %p124, %p125
    %p127 = scmp.le.s32.totalorder 1, %s9
    %p128 = scmp.lt.s32.totalorder %s9, 3
    %p129 = pnand %p127, %p128
    %p130 = pneg %p129
    // Predicated region
    $region9: #{tpu_custom_call.1} parent=5 // pred_check
      _
    $region10: #{tpu_custom_call.1} parent=5 // pred_check_branch
      %132 = sbr.rel (%p129) target = $region12
    $region11: #{tpu_custom_call.1} parent=5 // pred_region
      %s133 = ssub.s32 %s9, 1
      // Predicated region
      $region13: #{tpu_custom_call.1} parent=11 // pred_check
        %p134 = pneg %p42
      $region14: #{tpu_custom_call.1} parent=11 // pred_check_branch
        %136 = sbr.rel (%p134) target = $region16
      $region15: #{tpu_custom_call.1} parent=11 // pred_region
        _
      $region16: #{tpu_custom_call.1} parent=11 // pred_fallthru
        _
      // Predicated region
      $region17: #{tpu_custom_call.1} parent=11 // pred_check
        %p137 = pneg %p63
      $region18: #{tpu_custom_call.1} parent=11 // pred_check_branch
        %139 = sbr.rel (%p137) target = $region20
      $region19: #{tpu_custom_call.1} parent=11 // pred_region
        _
      $region20: #{tpu_custom_call.1} parent=11 // pred_fallthru
        _
    $region12: #{tpu_custom_call.1} parent=5 // pred_fallthru
      _
    %p140 = scmp.lt.s32.totalorder %s9, 2
    // Predicated region
    $region21: #{tpu_custom_call.1} parent=5 // pred_check
      %p141 = pneg %p140
    $region22: #{tpu_custom_call.1} parent=5 // pred_check_branch
      %143 = sbr.rel (%p141) target = $region24
    $region23: #{tpu_custom_call.1} parent=5 // pred_region
      // Predicated region
      $region25: #{tpu_custom_call.1} parent=23 // pred_check
        %p144 = pneg %p85
      $region26: #{tpu_custom_call.1} parent=23 // pred_check_branch
        %146 = sbr.rel (%p144) target = $region28
      $region27: #{tpu_custom_call.1} parent=23 // pred_region
        %p147 = scmp.lt.s32.totalorder %s16, 1
        %s148 = scalar_select %p147, %s16, 1
        %p149 = scmp.lt.s32.totalorder %s17, 0
        %s150 = scalar_select %p149, %s17, 0
        %s151 = smul.addr %s148, 4
        %s152 = sadd.s32 %s150, %s151
        %s153 = smul.addr %s152, 8
        %s154 = scalar_lea.vmem %s2, %s153
      $region28: #{tpu_custom_call.1} parent=23 // pred_fallthru
        _
    $region24: #{tpu_custom_call.1} parent=5 // pred_fallthru
      _
    %p155 = scmp.le.s32.totalorder 1, %s9
    %p156 = scmp.lt.s32.totalorder %s9, 3
    %p157 = pnand %p155, %p156
    %p158 = pneg %p157
    // Predicated region
    $region29: #{tpu_custom_call.1} parent=5 // pred_check
      _
    $region30: #{tpu_custom_call.1} parent=5 // pred_check_branch
      %160 = sbr.rel (%p157) target = $region32
    $region31: #{tpu_custom_call.1} parent=5 // pred_region
      %s161 = ssub.s32 %s9, 1
      %p162 = pneg %p42
      %p163 = pneg %p39
      %p164 = pneg %p63
      %p165 = pneg %p60
      %p166 = scmp.lt.s32.totalorder %s18, 1
      %s167 = scalar_select %p166, %s18, 1
      %p168 = scmp.lt.s32.totalorder %s19, 0
      %s169 = scalar_select %p168, %s19, 0
      %s170 = smul.addr %s167, 4
      %s171 = sadd.s32 %s169, %s170
      %s172 = smul.addr %s171, 8
      %s173 = scalar_lea.vmem %s2, %s172
      %p174 = pneg %p91
      %p175 = pneg %p88
      %p176 = pneg %p119
      %p177 = pneg %p116
      %p178 = scmp.lt.s32.totalorder %s18, 1
      %s179 = scalar_select %p178, %s18, 1
      %p180 = scmp.lt.s32.totalorder %s19, 0
      %s181 = scalar_select %p180, %s19, 0
      %s182 = smul.addr %s179, 16
      %s183 = sadd.s32 %s181, %s182
      %s184 = smul.addr %s183, 8
      %s185 = scalar_lea.vmem %s3, %s184
      %p186 = scmp.lt.s32.totalorder %s18, 1
      %s187 = scalar_select %p186, %s18, 1
      %p188 = scmp.lt.s32.totalorder %s19, 0
      %s189 = scalar_select %p188, %s19, 0
      %s190 = smul.addr %s187, 4
      %s191 = sadd.s32 %s189, %s190
      %s192 = smul.addr %s191, 8
      %s193 = scalar_lea.vmem %s2, %s192
      %p194 = scmp.lt.s32.totalorder %s18, 1
      %s195 = scalar_select %p194, %s18, 1
      %p196 = scmp.lt.s32.totalorder %s19, 0
      %s197 = scalar_select %p196, %s19, 0
      %s198 = smul.addr %s195, 16
      %s199 = sadd.s32 %s197, %s198
      %s200 = smul.addr %s199, 8
      %s201 = scalar_lea.vmem %s3, %s200
      %v202 = vld [vmem:[%s0] sm:$0xff]
      %v203 = vld [vmem:[%s0 + $0x8] sm:$0xff]
      %v204 = vld [vmem:[%s0 + $0x10] sm:$0xff]
      %v205 = vld [vmem:[%s0 + $0x18] sm:$0xff]
      %v206 = vld [vmem:[%s0 + $0x20] sm:$0xff]
      %v207 = vld [vmem:[%s0 + $0x28] sm:$0xff]
      %v208 = vld [vmem:[%s0 + $0x30] sm:$0xff]
      %v209 = vld [vmem:[%s0 + $0x38] sm:$0xff]
      %v210 = vld [vmem:[%s0 + $0x40] sm:$0xff]
      %v211 = vld [vmem:[%s0 + $0x48] sm:$0xff]
      %v212 = vld [vmem:[%s0 + $0x50] sm:$0xff]
      %v213 = vld [vmem:[%s0 + $0x58] sm:$0xff]
      %v214 = vld [vmem:[%s0 + $0x60] sm:$0xff]
      %v215 = vld [vmem:[%s0 + $0x68] sm:$0xff]
      %v216 = vld [vmem:[%s0 + $0x70] sm:$0xff]
      %v217 = vld [vmem:[%s0 + $0x78] sm:$0xf]
      %v218 = vld [vmem:[%s193] sm:$0xff]
      %v219 = vld [vmem:[%s193 + $0x8] sm:$0xff]
      %v220 = vld [vmem:[%s193 + $0x10] sm:$0xff]
      %v221 = vld [vmem:[%s193 + $0x18] sm:$0xff]
      %v222 = vld [vmem:[%s1] sm:$0xff]
      %v223 = vld [vmem:[%s1 + $0x8] sm:$0xff]
      %v224 = vld [vmem:[%s1 + $0x10] sm:$0xff]
      %v225 = vld [vmem:[%s1 + $0x18] sm:$0xff]
      %v226 = vld [vmem:[%s1 + $0x20] sm:$0xff]
      %v227 = vld [vmem:[%s1 + $0x28] sm:$0xff]
      %v228 = vld [vmem:[%s1 + $0x30] sm:$0xff]
      %v229 = vld [vmem:[%s1 + $0x38] sm:$0xff]
      %v230 = vld [vmem:[%s1 + $0x40] sm:$0xff]
      %v231 = vld [vmem:[%s1 + $0x48] sm:$0xff]
      %v232 = vld [vmem:[%s1 + $0x50] sm:$0xff]
      %v233 = vld [vmem:[%s1 + $0x58] sm:$0xff]
      %v234 = vld [vmem:[%s1 + $0x60] sm:$0xff]
      %v235 = vld [vmem:[%s1 + $0x68] sm:$0xff]
      %v236 = vld [vmem:[%s1 + $0x70] sm:$0xff]
      %v237 = vld [vmem:[%s1 + $0x78] sm:$0xf]
      %239 = vset.pattern.permute.xlu0 0
      %240 = vperm.xlu0 %239, %v222
      %v241 = vpop.permute.xlu0 %240
      %244 = vset.pattern.permute.xlu0 0
      %245 = vperm.xlu0 %244, %v223
      %v246 = vpop.permute.xlu0 %245
      %249 = vset.pattern.permute.xlu0 0
      %250 = vperm.xlu0 %249, %v224
      %v251 = vpop.permute.xlu0 %250
      %254 = vset.pattern.permute.xlu0 0
      %255 = vperm.xlu0 %254, %v225
      %v256 = vpop.permute.xlu0 %255
      %259 = vset.pattern.permute.xlu0 0
      %260 = vperm.xlu0 %259, %v226
      %v261 = vpop.permute.xlu0 %260
      %264 = vset.pattern.permute.xlu0 0
      %265 = vperm.xlu0 %264, %v227
      %v266 = vpop.permute.xlu0 %265
      %269 = vset.pattern.permute.xlu0 0
      %270 = vperm.xlu0 %269, %v228
      %v271 = vpop.permute.xlu0 %270
      %274 = vset.pattern.permute.xlu0 0
      %275 = vperm.xlu0 %274, %v229
      %v276 = vpop.permute.xlu0 %275
      %279 = vset.pattern.permute.xlu0 0
      %280 = vperm.xlu0 %279, %v230
      %v281 = vpop.permute.xlu0 %280
      %284 = vset.pattern.permute.xlu0 0
      %285 = vperm.xlu0 %284, %v231
      %v286 = vpop.permute.xlu0 %285
      %289 = vset.pattern.permute.xlu0 0
      %290 = vperm.xlu0 %289, %v232
      %v291 = vpop.permute.xlu0 %290
      %294 = vset.pattern.permute.xlu0 0
      %295 = vperm.xlu0 %294, %v233
      %v296 = vpop.permute.xlu0 %295
      %299 = vset.pattern.permute.xlu0 0
      %300 = vperm.xlu0 %299, %v234
      %v301 = vpop.permute.xlu0 %300
      %304 = vset.pattern.permute.xlu0 0
      %305 = vperm.xlu0 %304, %v235
      %v306 = vpop.permute.xlu0 %305
      %309 = vset.pattern.permute.xlu0 0
      %310 = vperm.xlu0 %309, %v236
      %v311 = vpop.permute.xlu0 %310
      %314 = vset.pattern.permute.xlu0 0
      %315 = vperm.xlu0 %314, %v237
      %v316 = vpop.permute.xlu0 %315
      %vm318 = vcmask 261120
      %v320 = vsel %vm318, %v202, 0
      %v323 = vsel %vm318, %v203, 0
      %v326 = vsel %vm318, %v204, 0
      %v329 = vsel %vm318, %v205, 0
      %v332 = vsel %vm318, %v206, 0
      %v335 = vsel %vm318, %v207, 0
      %v338 = vsel %vm318, %v208, 0
      %v341 = vsel %vm318, %v209, 0
      %v344 = vsel %vm318, %v210, 0
      %v347 = vsel %vm318, %v211, 0
      %v350 = vsel %vm318, %v212, 0
      %v353 = vsel %vm318, %v213, 0
      %v356 = vsel %vm318, %v214, 0
      %v359 = vsel %vm318, %v215, 0
      %v362 = vsel %vm318, %v216, 0
      %v365 = vsel %vm318, %v217, 0
      %367 = vmatpush.msra.mxu0 0.0
      %368 = vmatpush.msra.mxu0 0.0
      %369 = vmatpush.msra.mxu0 0.0
      %370 = vmatpush.msra.mxu0 0.0
      %371 = vmatpush.msra.mxu0 0.0
      %372 = vmatpush.msra.mxu0 0.0
      %373 = vmatpush.msra.mxu0 0.0
      %374 = vmatpush.msra.mxu0 0.0
      %375 = vmatpush.msra.mxu0 0.0
      %376 = vmatpush.msra.mxu0 0.0
      %377 = vmatpush.msra.mxu0 0.0
      %378 = vmatpush.msra.mxu0 0.0
      %379 = vmatpush.msra.mxu0 %v221
      %380 = vmatpush.msra.mxu0 %v220
      %381 = vmatpush.msra.mxu0 %v219
      %382 = vmatpush.msra.mxu0 %v218
      %383 = vmatmul.f32.gmra.mxu0 %v320
      %v384 = vpop.f32.mrf.mxu0
      %v385 = vadd.f32 %v241, %v384
      %386 = vmatmul.f32.gmra.mxu0 %v323
      %v387 = vpop.f32.mrf.mxu0
      %v388 = vadd.f32 %v246, %v387
      %389 = vmatmul.f32.gmra.mxu0 %v326
      %v390 = vpop.f32.mrf.mxu0
      %v391 = vadd.f32 %v251, %v390
      %392 = vmatmul.f32.gmra.mxu0 %v329
      %v393 = vpop.f32.mrf.mxu0
      %v394 = vadd.f32 %v256, %v393
      %395 = vmatmul.f32.gmra.mxu0 %v332
      %v396 = vpop.f32.mrf.mxu0
      %v397 = vadd.f32 %v261, %v396
      %398 = vmatmul.f32.gmra.mxu0 %v335
      %v399 = vpop.f32.mrf.mxu0
      %v400 = vadd.f32 %v266, %v399
      %401 = vmatmul.f32.gmra.mxu0 %v338
      %v402 = vpop.f32.mrf.mxu0
      %v403 = vadd.f32 %v271, %v402
      %404 = vmatmul.f32.gmra.mxu0 %v341
      %v405 = vpop.f32.mrf.mxu0
      %v406 = vadd.f32 %v276, %v405
      %407 = vmatmul.f32.gmra.mxu0 %v344
      %v408 = vpop.f32.mrf.mxu0
      %v409 = vadd.f32 %v281, %v408
      %410 = vmatmul.f32.gmra.mxu0 %v347
      %v411 = vpop.f32.mrf.mxu0
      %v412 = vadd.f32 %v286, %v411
      %413 = vmatmul.f32.gmra.mxu0 %v350
      %v414 = vpop.f32.mrf.mxu0
      %v415 = vadd.f32 %v291, %v414
      %416 = vmatmul.f32.gmra.mxu0 %v353
      %v417 = vpop.f32.mrf.mxu0
      %v418 = vadd.f32 %v296, %v417
      %419 = vmatmul.f32.gmra.mxu0 %v356
      %v420 = vpop.f32.mrf.mxu0
      %v421 = vadd.f32 %v301, %v420
      %422 = vmatmul.f32.gmra.mxu0 %v359
      %v423 = vpop.f32.mrf.mxu0
      %v424 = vadd.f32 %v306, %v423
      %425 = vmatmul.f32.gmra.mxu0 %v362
      %v426 = vpop.f32.mrf.mxu0
      %v427 = vadd.f32 %v311, %v426
      %428 = vmatmul.f32.gmra.mxu0 %v365
      %v429 = vpop.f32.mrf.mxu0
      %v430 = vadd.f32 %v316, %v429
      %431 = vdwg.mxu0
      %vm432 = vcmask 523264
      %433 = vst.msk [vmem:[%s201] sm:$0xff] %vm432, %v385
      %434 = vst.msk [vmem:[%s201 + $0x8] sm:$0xff] %vm432, %v388
      %435 = vst.msk [vmem:[%s201 + $0x10] sm:$0xff] %vm432, %v391
      %436 = vst.msk [vmem:[%s201 + $0x18] sm:$0xff] %vm432, %v394
      %437 = vst.msk [vmem:[%s201 + $0x20] sm:$0xff] %vm432, %v397
      %438 = vst.msk [vmem:[%s201 + $0x28] sm:$0xff] %vm432, %v400
      %439 = vst.msk [vmem:[%s201 + $0x30] sm:$0xff] %vm432, %v403
      %440 = vst.msk [vmem:[%s201 + $0x38] sm:$0xff] %vm432, %v406
      %441 = vst.msk [vmem:[%s201 + $0x40] sm:$0xff] %vm432, %v409
      %442 = vst.msk [vmem:[%s201 + $0x48] sm:$0xff] %vm432, %v412
      %443 = vst.msk [vmem:[%s201 + $0x50] sm:$0xff] %vm432, %v415
      %444 = vst.msk [vmem:[%s201 + $0x58] sm:$0xff] %vm432, %v418
      %445 = vst.msk [vmem:[%s201 + $0x60] sm:$0xff] %vm432, %v421
      %446 = vst.msk [vmem:[%s201 + $0x68] sm:$0xff] %vm432, %v424
      %447 = vst.msk [vmem:[%s201 + $0x70] sm:$0xff] %vm432, %v427
      %vm448 = vcmask 519168
      %449 = vst.msk [vmem:[%s201 + $0x78] sm:$0xf] %vm448, %v430
      %p450 = scmp.lt.s32.totalorder %s18, 1
      %s451 = scalar_select %p450, %s18, 1
      %p452 = scmp.lt.s32.totalorder %s19, 0
      %s453 = scalar_select %p452, %s19, 0
      %s454 = smul.addr %s451, 16
      %s455 = sadd.s32 %s453, %s454
      %s456 = smul.addr %s455, 8
      %s457 = scalar_lea.vmem %s3, %s456
      // Predicated region
      $region33: #{tpu_custom_call.1} parent=31 // pred_check
        %p458 = pneg %p116
      $region34: #{tpu_custom_call.1} parent=31 // pred_check_branch
        %460 = sbr.rel (%p458) target = $region36
      $region35: #{tpu_custom_call.1} parent=31 // pred_region
        _
      $region36: #{tpu_custom_call.1} parent=31 // pred_fallthru
        _
    $region32: #{tpu_custom_call.1} parent=5 // pred_fallthru
      _
    %p461 = scmp.le.s32.totalorder 2, %s9
    // Predicated region
    $region37: #{tpu_custom_call.1} parent=5 // pred_check
      %p462 = pneg %p461
    $region38: #{tpu_custom_call.1} parent=5 // pred_check_branch
      %464 = sbr.rel (%p462) target = $region40
    $region39: #{tpu_custom_call.1} parent=5 // pred_region
      %s465 = ssub.s32 %s9, 2
      // Predicated region
      $region41: #{tpu_custom_call.1} parent=39 // pred_check
        %p466 = pneg %p122
      $region42: #{tpu_custom_call.1} parent=39 // pred_check_branch
        %468 = sbr.rel (%p466) target = $region44
      $region43: #{tpu_custom_call.1} parent=39 // pred_region
        %p469 = scmp.lt.s32.totalorder %s20, 1
        %s470 = scalar_select %p469, %s20, 1
        %p471 = scmp.lt.s32.totalorder %s21, 0
        %s472 = scalar_select %p471, %s21, 0
        %s473 = smul.addr %s470, 16
        %s474 = sadd.s32 %s472, %s473
        %s475 = smul.addr %s474, 8
        %s476 = scalar_lea.vmem %s3, %s475
      $region44: #{tpu_custom_call.1} parent=39 // pred_fallthru
        _
    $region40: #{tpu_custom_call.1} parent=5 // pred_fallthru
      _
  $region6: #{tpu_custom_call.1} parent=0 // loop_footer
    %s13 = sadd.s32 1, %s9
  $region7: #{tpu_custom_call.1} parent=0 // loop_footer_branch
    %8 = sbr.rel target = $region3
  $region8: #{tpu_custom_call.1} parent=0 // loop_exit
    _

</llo_original>
